<compile_context>
chip_gen: v5e
topology: v5e:2x2
jax: 0.10.0
libtpu: 0.0.40
codegen_flags: <defaults>
</compile_context>

<pallas_src>
import functools
import math

import jax
import jax.numpy as jnp
from jax.experimental import pallas as pl
from jax.experimental.pallas import tpu as pltpu

LN_EPS = 1e-6
LANE = 128                        # TPU lane width: pad the output feature axis to this
DEFAULT_TILE_N = 1024             # rows per grid step (sweep 512-2048); clamped by VMEM budget
VMEM_BUDGET = 48 * 1024 * 1024    # conservative: fits v7x's 64 MiB/TC; can be raised on v5e/v6e
VMEM_HEADROOM = 4 * 1024 * 1024


def _round_up(v, m):
    return (v + m - 1) // m * m


def _pad_last(a, target):
    pad = target - a.shape[-1]
    if pad == 0:
        return a
    return jnp.pad(a, [(0, 0)] * (a.ndim - 1) + [(0, pad)])


def _choose_tile(n, rnn_size, a_pad, x_item, out_item, tile_n):
    """Pick the row-tile size and grid length.

    * Sized so double-buffered x/out tiles plus the (double-buffered) resident
      params stay under the conservative 48 MiB VMEM budget (v7x-safe).
    * At least 2 grid steps with an even count so ("parallel",) dimension
      semantics give both v7x TensorCores equal work; on v5e/v6e (1 TC) the
      extra step costs only ~0.35 us.
    """
    param_bytes = 2 * (rnn_size * a_pad * x_item + 3 * a_pad * 4)
    row_bytes = 2 * (rnn_size * x_item + a_pad * out_item)   # double-buffered x + out
    avail = max(row_bytes * 8, VMEM_BUDGET - VMEM_HEADROOM - param_bytes)
    max_tn = max(8, (avail // row_bytes) // 8 * 8)
    tn = max(8, min(tile_n, max_tn))
    if n <= 8:
        return n, 1                      # single tiny tile: block equals the full row extent
    num_tiles = max(2, pl.cdiv(n, tn))
    if num_tiles % 2:
        num_tiles += 1                   # even split across v7x's two TensorCores
    tn = _round_up(pl.cdiv(n, num_tiles), 8)
    return tn, pl.cdiv(n, tn)


def _proj_ln_kernel(x_ref, w_ref, b_ref, g_ref, beta_ref, o_ref, *, a_true):
    # x_ref:    (tn, rnn_size)     compute dtype (bf16)
    # w_ref:    (rnn_size, a_pad)  compute dtype, zero-padded columns
    # b_ref:    (1, a_pad) f32     linear bias (zero-padded)
    # g_ref:    (1, a_pad) f32     LayerNorm gain a_2 (zero-padded)
    # beta_ref: (1, a_pad) f32     LayerNorm bias b_2 (zero-padded)
    # o_ref:    (tn, a_pad)

    # MXU matmul in storage dtype (bf16 operands), f32 accumulation.
    y = jnp.dot(x_ref[...], w_ref[...], preferred_element_type=jnp.float32)
    y = y + b_ref[...]   # padded columns of w and b are 0 -> padded y columns are exactly 0

    # One-pass LayerNorm statistics over the TRUE width: padded columns
    # contribute exactly 0 to both s1 and s2, so no mask is needed.
    s1 = jnp.sum(y, axis=-1, keepdims=True)
    s2 = jnp.sum(y * y, axis=-1, keepdims=True)
    mean = s1 * jnp.float32(1.0 / a_true)
    var = jnp.maximum((s2 - s1 * mean) * jnp.float32(1.0 / (a_true - 1)), 0.0)
    std = jnp.sqrt(var)
    # EUP reciprocal (~2^-12 rel error); the kernel is HBM-bound so approx=False
    # would also be essentially free if tighter accuracy is required.
    inv = pl.reciprocal(std + jnp.float32(LN_EPS), approx=True)
    z = (y - mean) * inv

    o_ref[...] = (g_ref[...] * z + beta_ref[...]).astype(o_ref.dtype)


def actor_projector(x, w, b, gain, beta, *, tile_n=DEFAULT_TILE_N,
                    compute_dtype=jnp.bfloat16, out_dtype=None):
    """x: (batch, *, rnn_size) -> (batch, *, action_size).

    w is the transpose of torch nn.Linear weight, i.e. (rnn_size, action_size).
    b, gain (a_2), beta (b_2) have shape (1, action_size) or (action_size,).
    """
    *lead, rnn_size = x.shape
    rs_w, action_size = w.shape
    assert rs_w == rnn_size
    assert action_size > 1, "unbiased (n-1) variance requires action_size > 1"
    out_dtype = out_dtype or x.dtype

    n = math.prod(lead) if lead else 1
    a_pad = _round_up(action_size, LANE)       # lane-dense output / full MXU columns

    # bf16 transport: cast BEFORE the pallas_call so the HBM->VMEM DMA of x
    # moves half the bytes (the kernel is HBM-read-bound on x).
    x2d = x.reshape(n, rnn_size).astype(compute_dtype)
    w_p = _pad_last(w.astype(compute_dtype), a_pad)
    b_p = _pad_last(jnp.reshape(b, (1, action_size)).astype(jnp.float32), a_pad)
    g_p = _pad_last(jnp.reshape(gain, (1, action_size)).astype(jnp.float32), a_pad)
    bb_p = _pad_last(jnp.reshape(beta, (1, action_size)).astype(jnp.float32), a_pad)

    x_item = jnp.dtype(compute_dtype).itemsize
    out_item = jnp.dtype(out_dtype).itemsize
    tn, num_tiles = _choose_tile(n, rnn_size, a_pad, x_item, out_item, tile_n)

    need = (2 * tn * (rnn_size * x_item + a_pad * out_item)          # x/out double buffers
            + 2 * (rnn_size * a_pad * x_item + 3 * a_pad * 4))       # resident params
    vmem_limit = int(min(VMEM_BUDGET, max(16 * 1024 * 1024, need + VMEM_HEADROOM)))

    cost = pl.CostEstimate(
        flops=2 * n * rnn_size * a_pad,
        transcendentals=2 * n,   # one sqrt + one reciprocal per row
        bytes_accessed=(n * rnn_size * x_item
                        + rnn_size * a_pad * x_item
                        + 3 * a_pad * 4
                        + n * a_pad * out_item),
    )

    out_pad = pl.pallas_call(
        functools.partial(_proj_ln_kernel, a_true=action_size),
        out_shape=jax.ShapeDtypeStruct((n, a_pad), out_dtype),
        grid_spec=pltpu.PrefetchScalarGridSpec(
            num_scalar_prefetch=0,
            grid=(num_tiles,),
            in_specs=[
                pl.BlockSpec((tn, rnn_size), lambda i: (i, 0)),
                pl.BlockSpec((rnn_size, a_pad), lambda i: (0, 0)),
                pl.BlockSpec((1, a_pad), lambda i: (0, 0)),
                pl.BlockSpec((1, a_pad), lambda i: (0, 0)),
                pl.BlockSpec((1, a_pad), lambda i: (0, 0)),
            ],
            out_specs=pl.BlockSpec((tn, a_pad), lambda i: (i, 0)),
        ),
        compiler_params=pltpu.CompilerParams(
            dimension_semantics=("parallel",),
            vmem_limit_bytes=vmem_limit,
        ),
        cost_estimate=cost,
    )(x2d, w_p, b_p, g_p, bb_p)

    out2d = out_pad[:, :action_size] if a_pad != action_size else out_pad
    return out2d.reshape(*lead, action_size)


def _reference(x, w, b, gain, beta, compute_dtype=jnp.bfloat16):
    """Module semantics on the same bf16-rounded operands the kernel consumes."""
    xf = x.astype(compute_dtype).astype(jnp.float32)
    wf = w.astype(compute_dtype).astype(jnp.float32)
    y = jnp.einsum("...r,ra->...a", xf, wf,
                   precision=jax.lax.Precision.HIGHEST) + jnp.reshape(b, (-1,))
    mean = jnp.mean(y, axis=-1, keepdims=True)
    d = y - mean
    var = jnp.sum(d * d, axis=-1, keepdims=True) / (y.shape[-1] - 1)
    std = jnp.sqrt(var)
    out = jnp.reshape(gain, (-1,)) * d / (std + LN_EPS) + jnp.reshape(beta, (-1,))
    return out.astype(x.dtype)


if __name__ == "__main__":
    key = jax.random.PRNGKey(0)
    k1, k2, k3, k4, k5, k6, k7 = jax.random.split(key, 7)

    # ---- Test 1: small module-consistent shapes, padded lane-dense path -----
    batch, seq, rnn_size, action_size = 2, 8, 32, 16
    x = jax.random.normal(k1, (batch, seq, rnn_size), dtype=jnp.float32)
    # torch nn.Linear weight is (action_size, rnn_size); we store the transpose.
    w = (jax.random.uniform(k2, (rnn_size, action_size), dtype=jnp.float32) - 0.5) * 0.2
    b = (jax.random.uniform(k3, (1, action_size), dtype=jnp.float32) - 0.5) * 0.2
    gain = 1.0 + 0.1 * jax.random.normal(k4, (1, action_size), dtype=jnp.float32)  # a_2
    beta = 0.1 * jax.random.normal(k5, (1, action_size), dtype=jnp.float32)        # b_2

    out = jax.block_until_ready(actor_projector(x, w, b, gain, beta))
    ref = _reference(x, w, b, gain, beta)
    assert out.shape == (batch, seq, action_size)
    assert jnp.allclose(out, ref, atol=5e-3, rtol=5e-3), \
        float(jnp.max(jnp.abs(out - ref)))

    # ---- Test 2: multi-tile path, ragged last tile, already lane-dense A ----
    b2, s2, r2, a2 = 4, 301, 128, 128          # N = 1204 -> 2 even tiles, last one ragged
    x2 = jax.random.normal(k6, (b2, s2, r2), dtype=jnp.float32)
    kw2, kb2 = jax.random.split(k7)
    w2 = (jax.random.uniform(kw2, (r2, a2), dtype=jnp.float32) - 0.5) * 0.1
    bb2 = (jax.random.uniform(kb2, (1, a2), dtype=jnp.float32) - 0.5) * 0.1
    g2 = jnp.ones((1, a2), dtype=jnp.float32)
    bt2 = jnp.zeros((1, a2), dtype=jnp.float32)

    out2 = jax.block_until_ready(actor_projector(x2, w2, bb2, g2, bt2))
    ref2 = _reference(x2, w2, bb2, g2, bt2)
    assert out2.shape == (b2, s2, a2)
    assert jnp.allclose(out2, ref2, atol=5e-3, rtol=5e-3), \
        float(jnp.max(jnp.abs(out2 - ref2)))

    print("KERNEL_OK")
</pallas_src>

<mosaic_0001>
module attributes {stable_mosaic.version = 11 : i64} {
  func.func @_proj_ln_kernel(%arg0: i32, %arg1: memref<8x32xbf16, #tpu.memory_space<vmem>>, %arg2: memref<32x128xbf16, #tpu.memory_space<vmem>>, %arg3: memref<1x128xf32, #tpu.memory_space<vmem>>, %arg4: memref<1x128xf32, #tpu.memory_space<vmem>>, %arg5: memref<1x128xf32, #tpu.memory_space<vmem>>, %arg6: memref<8x128xf32, #tpu.memory_space<vmem>>) attributes {dimension_semantics = [#tpu.dimension_semantics<parallel>], iteration_bounds = array<i64: 2>, scalar_prefetch = 0 : i64, scratch_operands = 0 : i64, tpu.core_type = #tpu.core_type<tc>, window_params = [{transform_indices = @transform_0, window_bounds = array<i64: 8, 32>}, {pipeline_mode = #tpu.pipeline_mode<synchronous>, transform_indices = @transform_1, window_bounds = array<i64: 32, 128>}, {pipeline_mode = #tpu.pipeline_mode<synchronous>, transform_indices = @transform_2, window_bounds = array<i64: 1, 128>}, {pipeline_mode = #tpu.pipeline_mode<synchronous>, transform_indices = @transform_3, window_bounds = array<i64: 1, 128>}, {pipeline_mode = #tpu.pipeline_mode<synchronous>, transform_indices = @transform_4, window_bounds = array<i64: 1, 128>}, {transform_indices = @transform_5, window_bounds = array<i64: 8, 128>}]} {
    %c0 = arith.constant 0 : index
    %c0_0 = arith.constant 0 : index
    %0 = vector.load %arg1[%c0, %c0_0] : memref<8x32xbf16, #tpu.memory_space<vmem>>, vector<8x32xbf16>
    %c0_1 = arith.constant 0 : index
    %c0_2 = arith.constant 0 : index
    %1 = vector.load %arg2[%c0_1, %c0_2] : memref<32x128xbf16, #tpu.memory_space<vmem>>, vector<32x128xbf16>
    %cst = arith.constant dense<0.000000e+00> : vector<8x128xf32>
    %2 = tpu.matmul %0, %1, %cst {dimension_numbers = #tpu.dot_dimension_numbers<[1], [0], [0], [1], [0, 0, 1, 1], [], []>} : vector<8x32xbf16>, vector<32x128xbf16>, vector<8x128xf32> -> vector<8x128xf32>
    %c0_3 = arith.constant 0 : index
    %c0_4 = arith.constant 0 : index
    %3 = vector.load %arg3[%c0_3, %c0_4] : memref<1x128xf32, #tpu.memory_space<vmem>>, vector<1x128xf32>
    %4 = vector.broadcast %3 : vector<1x128xf32> to vector<8x128xf32>
    %5 = arith.addf %2, %4 : vector<8x128xf32>
    %cst_5 = arith.constant dense<0.000000e+00> : vector<8xf32>
    %6 = vector.multi_reduction <add>, %5, %cst_5 [1] : vector<8x128xf32> to vector<8xf32>
    %7 = vector.shape_cast %6 : vector<8xf32> to vector<8x1xf32>
    %8 = arith.mulf %5, %5 : vector<8x128xf32>
    %cst_6 = arith.constant dense<0.000000e+00> : vector<8xf32>
    %9 = vector.multi_reduction <add>, %8, %cst_6 [1] : vector<8x128xf32> to vector<8xf32>
    %10 = vector.shape_cast %9 : vector<8xf32> to vector<8x1xf32>
    %cst_7 = arith.constant 6.250000e-02 : f32
    %11 = vector.broadcast %cst_7 : f32 to vector<8x1xf32>
    %12 = arith.mulf %7, %11 : vector<8x1xf32>
    %13 = arith.mulf %7, %12 : vector<8x1xf32>
    %14 = arith.subf %10, %13 : vector<8x1xf32>
    %cst_8 = arith.constant 0.0666666701 : f32
    %15 = vector.broadcast %cst_8 : f32 to vector<8x1xf32>
    %16 = arith.mulf %14, %15 : vector<8x1xf32>
    %cst_9 = arith.constant 0.000000e+00 : f32
    %17 = vector.broadcast %cst_9 : f32 to vector<8x1xf32>
    %18 = arith.maximumf %16, %17 : vector<8x1xf32>
    %19 = math.sqrt %18 : vector<8x1xf32>
    %cst_10 = arith.constant 9.99999997E-7 : f32
    %20 = vector.broadcast %cst_10 : f32 to vector<8x1xf32>
    %21 = arith.addf %19, %20 : vector<8x1xf32>
    %22 = tpu.reciprocal %21 {approx = true} : vector<8x1xf32> -> vector<8x1xf32>
    %23 = vector.broadcast %12 : vector<8x1xf32> to vector<8x128xf32>
    %24 = arith.subf %5, %23 : vector<8x128xf32>
    %25 = vector.broadcast %22 : vector<8x1xf32> to vector<8x128xf32>
    %26 = arith.mulf %24, %25 : vector<8x128xf32>
    %c0_11 = arith.constant 0 : index
    %c0_12 = arith.constant 0 : index
    %27 = vector.load %arg4[%c0_11, %c0_12] : memref<1x128xf32, #tpu.memory_space<vmem>>, vector<1x128xf32>
    %28 = vector.broadcast %27 : vector<1x128xf32> to vector<8x128xf32>
    %29 = arith.mulf %28, %26 : vector<8x128xf32>
    %c0_13 = arith.constant 0 : index
    %c0_14 = arith.constant 0 : index
    %30 = vector.load %arg5[%c0_13, %c0_14] : memref<1x128xf32, #tpu.memory_space<vmem>>, vector<1x128xf32>
    %31 = vector.broadcast %30 : vector<1x128xf32> to vector<8x128xf32>
    %32 = arith.addf %29, %31 : vector<8x128xf32>
    %c0_15 = arith.constant 0 : index
    %c0_16 = arith.constant 0 : index
    %33 = vector.load %arg6[%c0_15, %c0_16] : memref<8x128xf32, #tpu.memory_space<vmem>>, vector<8x128xf32>
    tpu.vector_store %arg6[%c0_15, %c0_16], %32 {strides = array<i32>} : memref<8x128xf32, #tpu.memory_space<vmem>>, vector<8x128xf32>,
    return
  }
  func.func @transform_0(%arg0: i32) -> (i32, i32) {
    %c0_i32 = arith.constant 0 : i32
    %c0_i32_0 = arith.constant 0 : i32
    return %arg0, %c0_i32 : i32, i32
  }
  func.func @transform_1(%arg0: i32) -> (i32, i32) {
    %c0_i32 = arith.constant 0 : i32
    %c0_i32_0 = arith.constant 0 : i32
    %c0_i32_1 = arith.constant 0 : i32
    return %c0_i32, %c0_i32_0 : i32, i32
  }
  func.func @transform_2(%arg0: i32) -> (i32, i32) {
    %c0_i32 = arith.constant 0 : i32
    %c0_i32_0 = arith.constant 0 : i32
    %c0_i32_1 = arith.constant 0 : i32
    return %c0_i32, %c0_i32_0 : i32, i32
  }
  func.func @transform_3(%arg0: i32) -> (i32, i32) {
    %c0_i32 = arith.constant 0 : i32
    %c0_i32_0 = arith.constant 0 : i32
    %c0_i32_1 = arith.constant 0 : i32
    return %c0_i32, %c0_i32_0 : i32, i32
  }
  func.func @transform_4(%arg0: i32) -> (i32, i32) {
    %c0_i32 = arith.constant 0 : i32
    %c0_i32_0 = arith.constant 0 : i32
    %c0_i32_1 = arith.constant 0 : i32
    return %c0_i32, %c0_i32_0 : i32, i32
  }
  func.func @transform_5(%arg0: i32) -> (i32, i32) {
    %c0_i32 = arith.constant 0 : i32
    %c0_i32_0 = arith.constant 0 : i32
    return %arg0, %c0_i32 : i32, i32
  }
}

</mosaic_0001>

<llo_original>
// kernel: tpu_custom_call.1
$region0: #{tpu_custom_call.1}
  #allocation0 [shape = 'u32[]', space=smem, size = 0x4, offset = 0x4, fixed_abs, tag = 'smem constant byte address 0x4 - core index']
  #allocation1 [shape = 'u32[72,128]{1,0:T(1,128)}', space=vmem, size = 0x9000, scoped, tag = 'internal scratch']
  %s0 = inlined_call_operand.hbm [shape: bf16[16,32], index: 0, kind: input, shape index: {}]
  %s1 = inlined_call_operand.hbm [shape: bf16[32,128], index: 1, kind: input, shape index: {}]
  %s2 = inlined_call_operand.vmem [shape: f32[1,128], index: 2, kind: input, shape index: {}]
  %s3 = inlined_call_operand.vmem [shape: f32[1,128], index: 3, kind: input, shape index: {}]
  %s4 = inlined_call_operand.vmem [shape: f32[1,128], index: 4, kind: input, shape index: {}]
  %s5 = inlined_call_operand.hbm [shape: f32[16,128], index: 5, kind: output, shape index: {}]
  %s6 = sld [smem:[#allocation0]]
  $region61: #{tpu_custom_call.1} parent=0
    _
  %s8 = ssub.s32 1, %s6
  %s9 = scalar_select 0, %s8, %s6
  $region1: #{tpu_custom_call.1} parent=0
    #allocation2 [shape = 'u8[4096]{0}', space=vmem, size = 0x1000, scoped, tag = 'input window, operand 0']
    #allocation3 [shape = 's32[2]{0}', space=sflag, size = 0x8, scoped, tag = 'scoped memory for tpu_custom_call.1']
    #allocation4 [shape = 's32[2]{0}', space=sflag, size = 0x8, scoped, tag = 'scoped memory for tpu_custom_call.1']
    #allocation5 [shape = 'u8[8192]{0}', space=vmem, size = 0x2000, scoped, tag = 'input window, operand 1, single buffered']
    #allocation6 [shape = 's32[1]{0}', space=sflag, size = 0x4, scoped, tag = 'scoped memory for tpu_custom_call.1']
    #allocation7 [shape = 'u8[8192]{0}', space=vmem, size = 0x2000, scoped, tag = 'output window, operand 0']
    %10 = vsyncpa [#allocation3], 0
    %s11 = scalar_lea.sflag [#allocation3], 1
    %12 = vsyncpa %s11, 0
    %13 = vsyncpa [#allocation6], 0
    %14 = vsyncpa [#allocation4], 0
    %s15 = scalar_lea.sflag [#allocation4], 1
    %16 = vsyncpa %s15, 0
    loop: start=0, step=1, limit=4
    $region2: #{tpu_custom_call.1} parent=1 // loop_pre_header
      _
    $region3: #{tpu_custom_call.1} parent=1 // loop_header
      %s18 = sphi 0, %s22
      %p19 = scmp.ge.s32.totalorder %s18, 4
      %s28 = sphi 0, %s30
      %s31 = sphi 0, %s28
      %s32 = sphi 0, %s31
      %s48 = sphi 0, %s32
      %s52 = sphi 0, %s52
      %s54 = sphi 0, %s52
      %s55 = sphi 0, %s54
      %s69 = sphi 0, %s55
      %s73 = sphi 0, %s73
      %s75 = sphi 0, %s73
      %s76 = sphi 0, %s75
      %s90 = sphi 0, %s76
      %s94 = sphi 0, %s94
      %s96 = sphi 0, %s94
      %s97 = sphi 0, %s96
      %s111 = sphi 0, %s97
      %s115 = sphi 0, %s115
      %s117 = sphi 0, %s115
      %s118 = sphi 0, %s117
      %s132 = sphi 0, %s118
      %s138 = sphi 0, %s140
      %s141 = sphi 0, %s138
      %s142 = sphi 0, %s141
      %s158 = sphi 0, %s142
    $region4: #{tpu_custom_call.1} parent=1 // loop_header_branch
      %21 = sbr.rel (%p19) target = $region8
    $region5: #{tpu_custom_call.1} parent=1 // loop_body
      %s23 = ssub.s32 %s18, 1
      %s24 = ssub.s32 %s18, 2
      %s25 = sadd.s32 %s18, 1
      %s26 = ssub.s32 %s18, %s25
      %p27 = scmp.eq.s32.totalorder %s26, 0
      %s29 = sadd.s32 %s28, 1
      %s30 = scalar_select %p27, %s28, %s29
      %p33 = pneg %p27
      %p34 = scmp.eq.s32.totalorder %s18, 1
      %p35 = por %p33, %p34
      %p36 = scmp.ne.s32.totalorder %s28, %s31
      %p37 = scmp.eq.s32.totalorder %s18, 0
      %p38 = por %p36, %p37
      %p39 = scmp.ne.s32.totalorder %s28, %s31
      %p40 = scmp.eq.s32.totalorder %s23, 1
      %p41 = por %p39, %p40
      %p42 = scmp.ne.s32.totalorder %s31, %s32
      %p43 = scmp.eq.s32.totalorder %s23, 0
      %p44 = por %p42, %p43
      %p45 = scmp.ne.s32.totalorder %s31, %s32
      %p46 = scmp.eq.s32.totalorder %s24, 1
      %p47 = por %p45, %p46
      %p49 = scmp.ne.s32.totalorder %s32, %s48
      %p50 = scmp.eq.s32.totalorder %s24, 0
      %p51 = por %p49, %p50
      %s53 = sadd.s32 %s52, 1
      %p56 = scmp.eq.s32.totalorder %s18, 1
      %p57 = scmp.ne.s32.totalorder %s52, %s54
      %p58 = scmp.eq.s32.totalorder %s18, 0
      %p59 = por %p57, %p58
      %p60 = scmp.ne.s32.totalorder %s52, %s54
      %p61 = scmp.eq.s32.totalorder %s23, 1
      %p62 = por %p60, %p61
      %p63 = scmp.ne.s32.totalorder %s54, %s55
      %p64 = scmp.eq.s32.totalorder %s23, 0
      %p65 = por %p63, %p64
      %p66 = scmp.ne.s32.totalorder %s54, %s55
      %p67 = scmp.eq.s32.totalorder %s24, 1
      %p68 = por %p66, %p67
      %p70 = scmp.ne.s32.totalorder %s55, %s69
      %p71 = scmp.eq.s32.totalorder %s24, 0
      %p72 = por %p70, %p71
      %s74 = sadd.s32 %s73, 1
      %p77 = scmp.eq.s32.totalorder %s18, 1
      %p78 = scmp.ne.s32.totalorder %s73, %s75
      %p79 = scmp.eq.s32.totalorder %s18, 0
      %p80 = por %p78, %p79
      %p81 = scmp.ne.s32.totalorder %s73, %s75
      %p82 = scmp.eq.s32.totalorder %s23, 1
      %p83 = por %p81, %p82
      %p84 = scmp.ne.s32.totalorder %s75, %s76
      %p85 = scmp.eq.s32.totalorder %s23, 0
      %p86 = por %p84, %p85
      %p87 = scmp.ne.s32.totalorder %s75, %s76
      %p88 = scmp.eq.s32.totalorder %s24, 1
      %p89 = por %p87, %p88
      %p91 = scmp.ne.s32.totalorder %s76, %s90
      %p92 = scmp.eq.s32.totalorder %s24, 0
      %p93 = por %p91, %p92
      %s95 = sadd.s32 %s94, 1
      %p98 = scmp.eq.s32.totalorder %s18, 1
      %p99 = scmp.ne.s32.totalorder %s94, %s96
      %p100 = scmp.eq.s32.totalorder %s18, 0
      %p101 = por %p99, %p100
      %p102 = scmp.ne.s32.totalorder %s94, %s96
      %p103 = scmp.eq.s32.totalorder %s23, 1
      %p104 = por %p102, %p103
      %p105 = scmp.ne.s32.totalorder %s96, %s97
      %p106 = scmp.eq.s32.totalorder %s23, 0
      %p107 = por %p105, %p106
      %p108 = scmp.ne.s32.totalorder %s96, %s97
      %p109 = scmp.eq.s32.totalorder %s24, 1
      %p110 = por %p108, %p109
      %p112 = scmp.ne.s32.totalorder %s97, %s111
      %p113 = scmp.eq.s32.totalorder %s24, 0
      %p114 = por %p112, %p113
      %s116 = sadd.s32 %s115, 1
      %p119 = scmp.eq.s32.totalorder %s18, 1
      %p120 = scmp.ne.s32.totalorder %s115, %s117
      %p121 = scmp.eq.s32.totalorder %s18, 0
      %p122 = por %p120, %p121
      %p123 = scmp.ne.s32.totalorder %s115, %s117
      %p124 = scmp.eq.s32.totalorder %s23, 1
      %p125 = por %p123, %p124
      %p126 = scmp.ne.s32.totalorder %s117, %s118
      %p127 = scmp.eq.s32.totalorder %s23, 0
      %p128 = por %p126, %p127
      %p129 = scmp.ne.s32.totalorder %s117, %s118
      %p130 = scmp.eq.s32.totalorder %s24, 1
      %p131 = por %p129, %p130
      %p133 = scmp.ne.s32.totalorder %s118, %s132
      %p134 = scmp.eq.s32.totalorder %s24, 0
      %p135 = por %p133, %p134
      %s136 = ssub.s32 %s18, %s25
      %p137 = scmp.eq.s32.totalorder %s136, 0
      %s139 = sadd.s32 %s138, 1
      %s140 = scalar_select %p137, %s138, %s139
      %p143 = pneg %p137
      %p144 = scmp.eq.s32.totalorder %s18, 1
      %p145 = por %p143, %p144
      %p146 = scmp.ne.s32.totalorder %s138, %s141
      %p147 = scmp.eq.s32.totalorder %s18, 0
      %p148 = por %p146, %p147
      %p149 = scmp.ne.s32.totalorder %s138, %s141
      %p150 = scmp.eq.s32.totalorder %s23, 1
      %p151 = por %p149, %p150
      %p152 = scmp.ne.s32.totalorder %s141, %s142
      %p153 = scmp.eq.s32.totalorder %s23, 0
      %p154 = por %p152, %p153
      %p155 = scmp.ne.s32.totalorder %s141, %s142
      %p156 = scmp.eq.s32.totalorder %s24, 1
      %p157 = por %p155, %p156
      %p159 = scmp.ne.s32.totalorder %s142, %s158
      %p160 = scmp.eq.s32.totalorder %s24, 0
      %p161 = por %p159, %p160
      %p162 = scmp.le.s32.totalorder 1, %s18
      %p163 = scmp.lt.s32.totalorder %s18, 3
      %p164 = pnand %p162, %p163
      %p165 = pneg %p164
      // Predicated region
      $region9: #{tpu_custom_call.1} parent=5 // pred_check
        _
      $region10: #{tpu_custom_call.1} parent=5 // pred_check_branch
        %167 = sbr.rel (%p164) target = $region12
      $region11: #{tpu_custom_call.1} parent=5 // pred_region
        %s168 = ssub.s32 %s18, 1
        // Predicated region
        $region13: #{tpu_custom_call.1} parent=11 // pred_check
          %p169 = pneg %p65
        $region14: #{tpu_custom_call.1} parent=11 // pred_check_branch
          %171 = sbr.rel (%p169) target = $region16
        $region15: #{tpu_custom_call.1} parent=11 // pred_region
          %173 = vsyncadd [#allocation6], 0
          %s174 = sshll.u32 %s1, 4
          %s175 = int_to_ptr.hbm [resolvable:$true] %s174
          %s176 = sshll.u32 [#allocation5], 4
          %s177 = int_to_ptr.vmem [resolvable:$true] %s176
          %182 = dma.hbm_to_vmem [thread:$0]  %s175, 256, %s177, [#allocation6], 64, 64, 4
        $region16: #{tpu_custom_call.1} parent=11 // pred_fallthru
          _
        // Predicated region
        $region17: #{tpu_custom_call.1} parent=11 // pred_check
          %p183 = pneg %p86
        $region18: #{tpu_custom_call.1} parent=11 // pred_check_branch
          %185 = sbr.rel (%p183) target = $region20
        $region19: #{tpu_custom_call.1} parent=11 // pred_region
          _
        $region20: #{tpu_custom_call.1} parent=11 // pred_fallthru
          _
        // Predicated region
        $region21: #{tpu_custom_call.1} parent=11 // pred_check
          %p186 = pneg %p107
        $region22: #{tpu_custom_call.1} parent=11 // pred_check_branch
          %188 = sbr.rel (%p186) target = $region24
        $region23: #{tpu_custom_call.1} parent=11 // pred_region
          _
        $region24: #{tpu_custom_call.1} parent=11 // pred_fallthru
          _
        // Predicated region
        $region25: #{tpu_custom_call.1} parent=11 // pred_check
          %p189 = pneg %p128
        $region26: #{tpu_custom_call.1} parent=11 // pred_check_branch
          %191 = sbr.rel (%p189) target = $region28
        $region27: #{tpu_custom_call.1} parent=11 // pred_region
          _
        $region28: #{tpu_custom_call.1} parent=11 // pred_fallthru
          _
      $region12: #{tpu_custom_call.1} parent=5 // pred_fallthru
        _
      %p192 = scmp.lt.s32.totalorder %s18, 2
      // Predicated region
      $region29: #{tpu_custom_call.1} parent=5 // pred_check
        %p193 = pneg %p192
      $region30: #{tpu_custom_call.1} parent=5 // pred_check_branch
        %195 = sbr.rel (%p193) target = $region32
      $region31: #{tpu_custom_call.1} parent=5 // pred_region
        // Predicated region
        $region33: #{tpu_custom_call.1} parent=31 // pred_check
          %p196 = pneg %p38
        $region34: #{tpu_custom_call.1} parent=31 // pred_check_branch
          %198 = sbr.rel (%p196) target = $region36
        $region35: #{tpu_custom_call.1} parent=31 // pred_region
          %s199 = sand.u32 %s28, 1
          %s200 = scalar_lea.sflag [#allocation3], %s199
          %s201 = sand.u32 %s28, 1
          %s202 = smul.addr %s201, 4
          %s203 = scalar_lea.vmem [#allocation2], %s202
          %205 = vsyncadd %s200, 0
          %s206 = smul.addr %s18, 4
          %s207 = scalar_lea.hbm %s0, %s206
          %s209 = sshll.u32 %s207, 4
          %s210 = int_to_ptr.hbm [resolvable:$true] %s209
          %s211 = sshll.u32 %s203, 4
          %s212 = int_to_ptr.vmem [resolvable:$true] %s211
          %214 = dma.hbm_to_vmem [thread:$0]  %s210, 64, %s212, %s200
        $region36: #{tpu_custom_call.1} parent=31 // pred_fallthru
          _
      $region32: #{tpu_custom_call.1} parent=5 // pred_fallthru
        _
      %p215 = scmp.le.s32.totalorder 1, %s18
      %p216 = scmp.lt.s32.totalorder %s18, 3
      %p217 = pnand %p215, %p216
      %p218 = pneg %p217
      // Predicated region
      $region37: #{tpu_custom_call.1} parent=5 // pred_check
        _
      $region38: #{tpu_custom_call.1} parent=5 // pred_check_branch
        %220 = sbr.rel (%p217) target = $region40
      $region39: #{tpu_custom_call.1} parent=5 // pred_region
        %s221 = ssub.s32 %s18, 1
        %s222 = sand.u32 %s31, 1
        %s223 = scalar_lea.sflag [#allocation3], %s222
        %s224 = sand.u32 %s31, 1
        %s225 = smul.addr %s224, 4
        %s226 = scalar_lea.vmem [#allocation2], %s225
        // Predicated region
        $region41: #{tpu_custom_call.1} parent=39 // pred_check
          %p227 = pneg %p44
        $region42: #{tpu_custom_call.1} parent=39 // pred_check_branch
          %229 = sbr.rel (%p227) target = $region44
        $region43: #{tpu_custom_call.1} parent=39 // pred_region
          %231 = dma.done %s223, 64
        $region44: #{tpu_custom_call.1} parent=39 // pred_fallthru
          _
        // Predicated region
        $region45: #{tpu_custom_call.1} parent=39 // pred_check
          %p232 = pneg %p65
        $region46: #{tpu_custom_call.1} parent=39 // pred_check_branch
          %234 = sbr.rel (%p232) target = $region48
        $region47: #{tpu_custom_call.1} parent=39 // pred_region
          %236 = dma.done [#allocation6], 256
        $region48: #{tpu_custom_call.1} parent=39 // pred_fallthru
          _
        %s237 = sand.u32 %s31, 1
        %s238 = scalar_lea.sflag [#allocation3], %s237
        %s239 = sand.u32 %s31, 1
        %s240 = smul.addr %s239, 4
        %s241 = scalar_lea.vmem [#allocation2], %s240
        %p242 = pneg %p44
        %p243 = pneg %p41
        %p244 = pneg %p65
        %p245 = pneg %p62
        %p246 = pneg %p86
        %p247 = pneg %p83
        %p248 = pneg %p107
        %p249 = pneg %p104
        %p250 = pneg %p128
        %p251 = pneg %p125
        %p252 = pneg %p154
        %p253 = pneg %p151
        %s254 = sand.u32 %s141, 1
        %s255 = scalar_lea.sflag [#allocation4], %s254
        %s256 = sand.u32 %s141, 1
        %s257 = smul.addr %s256, 8
        %s258 = scalar_lea.vmem [#allocation7], %s257
        %v260 = vld [vmem:[%s226] sm:$0xf]
        %v261 = vld [vmem:[#allocation5] sm:$0xf]
        %v262 = vld [vmem:[#allocation5 + $0x4] sm:$0xf]
        %v263 = vld [vmem:[#allocation5 + $0x8] sm:$0xf]
        %v264 = vld [vmem:[#allocation5 + $0xc] sm:$0xf]
        %v265 = vld [vmem:[%s2] sm:$0x1]
        %v267 = vperm.slane %v265, 0
        %v273 = vunpack.c.l.b16 %v261
        %v274 = vunpack.c.l.b16 %v262
        %v275 = vunpack.c.l.b16 %v263
        %v276 = vunpack.c.l.b16 %v264
        %v277 = vpack.c.b16 %v274, %v273
        %v278 = vpack.c.b16 %v276, %v275
        %vm281 = vcmask 261120
        %v283 = vsel %vm281, %v260, 0
        %285 = vmatpush.bf16.msra.mxu0 0
        %286 = vmatpush.bf16.msra.mxu0 0
        %287 = vmatpush.bf16.msra.mxu0 0
        %288 = vmatpush.bf16.msra.mxu0 0
        %289 = vmatpush.bf16.msra.mxu0 0
        %290 = vmatpush.bf16.msra.mxu0 0
        %291 = vmatpush.bf16.msra.mxu0 %v278
        %292 = vmatpush.bf16.msra.mxu0 %v277
        %293 = vmatmul.bf16.gmra.mxu0 %v283
        %v294 = vpop.f32.mrf.mxu0
        %v295 = vadd.f32 %v267, %v294
        %v296 = vpop.f32.mrf.mxu0
        %297 = vdwg.mxu0
        %298 = vadd.xlane.f32.xlu0 %v295
        %v299 = vpop.xlane.xlu0 %298
        %v300 = vmul.f32 %v295, %v295
        %301 = vadd.xlane.f32.xlu0 %v300
        %v302 = vpop.xlane.xlu0 %301
        %v303 = vmul.f32 %v299, 0.0625
        %v304 = vmul.f32 %v299, %v303
        %v305 = vsub.f32 %v302, %v304
        %v306 = vmul.f32 %v305, 0.06666667
        %v307 = vmax.f32 %v306, 0.0
        %v308 = vrsqrt.pop %v307
        %v309 = vmul.f32 %v308, %v307
        %v310 = vmul.f32 %v309, %v308
        %v311 = vmul.f32 0.5, %v310
        %v312 = vsub.f32 1.5, %v311
        %v313 = vmul.f32 %v308, %v312
        %v314 = vmul.f32 %v307, %v313
        %vm315 = vcmp.eq.f32.partialorder %v307, inf
        %v316 = vsel %vm315, %v307, %v314
        %vm317 = vcmp.eq.f32.partialorder %v307, 0.0
        %v318 = vand.u32 %v307, 2147483648
        %v319 = vsel %vm317, %v318, %v316
        %v320 = vadd.f32 %v319, 1e-06
        %v321 = vrcp.pop %v320
        %v322 = vsub.f32 %v295, %v303
        %v323 = vmul.f32 %v322, %v321
        %v324 = vld [vmem:[%s3] sm:$0x1]
        %v326 = vperm.slane %v324, 0
        %v328 = vmul.f32 %v326, %v323
        %v329 = vld [vmem:[%s4] sm:$0x1]
        %v331 = vperm.slane %v329, 0
        %v333 = vadd.f32 %v328, %v331
        %334 = vst [vmem:[%s258] sm:$0xff] %v333
        %s335 = sand.u32 %s141, 1
        %s336 = scalar_lea.sflag [#allocation4], %s335
        %s337 = sand.u32 %s141, 1
        %s338 = smul.addr %s337, 8
        %s339 = scalar_lea.vmem [#allocation7], %s338
        // Predicated region
        $region49: #{tpu_custom_call.1} parent=39 // pred_check
          %p340 = pneg %p151
        $region50: #{tpu_custom_call.1} parent=39 // pred_check_branch
          %342 = sbr.rel (%p340) target = $region52
        $region51: #{tpu_custom_call.1} parent=39 // pred_region
          %344 = vsyncadd %s336, 0
          %s345 = smul.addr %s23, 8
          %s346 = scalar_lea.hbm %s5, %s345
          %s348 = sshll.u32 %s339, 4
          %s349 = int_to_ptr.vmem [resolvable:$true] %s348
          %s350 = sshll.u32 %s346, 4
          %s351 = int_to_ptr.hbm [resolvable:$true] %s350
          %353 = dma.vmem_to_hbm [thread:$0]  %s349, 128, %s351, %s336
        $region52: #{tpu_custom_call.1} parent=39 // pred_fallthru
          _
      $region40: #{tpu_custom_call.1} parent=5 // pred_fallthru
        _
      %p354 = scmp.le.s32.totalorder 2, %s18
      // Predicated region
      $region53: #{tpu_custom_call.1} parent=5 // pred_check
        %p355 = pneg %p354
      $region54: #{tpu_custom_call.1} parent=5 // pred_check_branch
        %357 = sbr.rel (%p355) target = $region56
      $region55: #{tpu_custom_call.1} parent=5 // pred_region
        %s358 = ssub.s32 %s18, 2
        // Predicated region
        $region57: #{tpu_custom_call.1} parent=55 // pred_check
          %p359 = pneg %p157
        $region58: #{tpu_custom_call.1} parent=55 // pred_check_branch
          %361 = sbr.rel (%p359) target = $region60
        $region59: #{tpu_custom_call.1} parent=55 // pred_region
          %s362 = sand.u32 %s142, 1
          %s363 = scalar_lea.sflag [#allocation4], %s362
          %s364 = sand.u32 %s142, 1
          %s365 = smul.addr %s364, 8
          %s366 = scalar_lea.vmem [#allocation7], %s365
          %368 = dma.done %s363, 128
        $region60: #{tpu_custom_call.1} parent=55 // pred_fallthru
          _
      $region56: #{tpu_custom_call.1} parent=5 // pred_fallthru
        _
    $region6: #{tpu_custom_call.1} parent=1 // loop_footer
      %s22 = sadd.s32 1, %s18
    $region7: #{tpu_custom_call.1} parent=1 // loop_footer_branch
      %17 = sbr.rel target = $region3
    $region8: #{tpu_custom_call.1} parent=1 // loop_exit
      _
    %369 = vsyncpa [#allocation3], 1
    %s370 = scalar_lea.sflag [#allocation3], 1
    %371 = vsyncpa %s370, 1
    %372 = vsyncpa [#allocation6], 1
    %373 = vsyncpa [#allocation4], 1
    %s374 = scalar_lea.sflag [#allocation4], 1
    %375 = vsyncpa %s374, 1

</llo_original>
